<compile_context>
chip_gen: v5e
topology: v5e:2x2
jax: 0.10.0
libtpu: 0.0.40
codegen_flags: <defaults>
</compile_context>

<pallas_src>
import jax
import jax.numpy as jnp
from jax import lax
from jax.experimental import pallas as pl
from jax.experimental.pallas import tpu as pltpu

EPS = 1e-5  # BatchNorm1d default eps


def _round_up(x, m):
    return (x + m - 1) // m * m


def _vmem_capacity_bytes():
    """Physical VMEM per TensorCore (64 MiB on v7x, 128 MiB on v5e/v6e)."""
    try:
        return int(pltpu.get_tpu_info().vmem_capacity_bytes)
    except Exception:
        return 64 << 20  # conservative (v7x-safe) default


# --------------------------------------------------------------------------
# Kernel 1: global average pool (as pre-scaled sum) + Linear, batch-streamed
# --------------------------------------------------------------------------
def _make_pool_linear_kernel_2d(HW, C):
    """Primary path: feature block is a lane-dense 2-D slab [TB, HW*C] (C % 128 == 0)."""
    def kernel(feat_ref, wt_ref, out_ref):
        # feat_ref: [TB, HW*C] bf16    wt_ref: [C, E_pad] bf16 (pre-scaled by 1/HW)
        # out_ref:  [TB, E_pad] f32
        tb = feat_ref.shape[0]
        acc = jnp.zeros((tb, C), jnp.float32)
        # Chunked spatial reduction: one lane-aligned (multiple-of-128 offset)
        # [TB, C] slice per spatial position, accumulated in f32.  No full-tile
        # f32 copy of the feature block is ever materialized.
        for h in range(HW):
            acc = acc + feat_ref[:, h * C:(h + 1) * C].astype(jnp.float32)
        out_ref[...] = jnp.dot(acc.astype(wt_ref.dtype), wt_ref[...],
                               preferred_element_type=jnp.float32)   # MXU, f32 acc
    return kernel


def _pool_linear_kernel_3d(feat_ref, wt_ref, out_ref):
    # Fallback layout for C % 128 != 0 (not the ResNet-152 case, where C=2048):
    # feat_ref: [TB, HW, C] bf16.  f32-accumulated reduce over the spatial axis
    # (the review's "at minimum" form), then MXU projection.
    pooled = jnp.sum(feat_ref[...], axis=1, dtype=jnp.float32)       # [TB, C]
    out_ref[...] = jnp.dot(pooled.astype(wt_ref.dtype), wt_ref[...],
                           preferred_element_type=jnp.float32)


# --------------------------------------------------------------------------
# Kernel 2: BatchNorm1d, training mode (batch stats, biased var, affine)
# --------------------------------------------------------------------------
def batchnorm_kernel(y_ref, gamma_ref, beta_ref, out_ref):
    y = y_ref[...]                                     # [B, E] f32
    mean = jnp.mean(y, axis=0, keepdims=True)          # [1, E] batch stats
    diff = y - mean
    var = jnp.mean(diff * diff, axis=0, keepdims=True)
    out_ref[...] = diff * lax.rsqrt(var + EPS) * gamma_ref[...] + beta_ref[...]
    # TODO(synk): running_mean/running_var updates (momentum=0.01) are not emitted;
    # if they are ever added, the stats path must re-account for the dropped Linear
    # bias (running_mean would otherwise be off by exactly -b).


# --------------------------------------------------------------------------
# Wrappers
# --------------------------------------------------------------------------
def prepare_params(w, b, gamma, beta, hw):
    """One-time (init-time) parameter prep, kept out of the hot path.

    w:  [E, C] PyTorch nn.Linear weight  ->  [C, E_pad] bf16, pre-transposed,
        pre-scaled by 1/hw (average-pool divisor folded into the weight so the
        kernel uses a plain sum), with E padded to a multiple of 128 so the
        streamed kernel's output store path stays unmasked / lane-dense.
    b:  [E] Linear bias; dropped -- training-mode BN subtracts the batch mean,
        so a constant per-feature bias cancels exactly.
    gamma, beta: [E] BatchNorm1d affine params -> [1, E] f32.
    """
    del b
    E, C = w.shape
    e_pad = _round_up(E, 128)
    wt = jnp.asarray(w, jnp.float32).T / float(hw)                   # [C, E]
    if e_pad != E:
        wt = jnp.pad(wt, ((0, 0), (0, e_pad - E)))
    wt = wt.astype(jnp.bfloat16)                                     # [C, E_pad]
    g2 = jnp.asarray(gamma, jnp.float32).reshape(1, -1)
    be2 = jnp.asarray(beta, jnp.float32).reshape(1, -1)
    return wt, g2, be2


def _pick_batch_tile(B, row_bytes, fixed_bytes, vmem_budget, max_tb):
    """Largest multiple-of-8 batch tile such that:
         * there are at least 2 grid steps (shards across v7x's 2 TensorCores),
         * the double-buffered working set fits the per-generation VMEM budget.
       Never falls back to TB == B for B > 8; grid = cdiv(B, TB) handles awkward
       batch sizes with a masked partial last tile."""
    max_tb = max(8, (max_tb // 8) * 8)
    if B <= 8:
        return B
    tb = min(max_tb, _round_up(pl.cdiv(B, 2), 8))
    if tb >= B:                       # e.g. 8 < B < 16: two tiles of 8 (2nd partial)
        tb = 8
    while tb > 8 and 2 * tb * row_bytes + fixed_bytes > vmem_budget:
        tb -= 8
    return tb


def enc_forward(feat_maps, wt, gamma2, beta2, *, max_batch_tile=64):
    """feat_maps: [B, H, W, C] NHWC (TPU-native) output of the frozen resnet trunk (bf16).
       wt:        [C, E_pad]   pre-transposed, 1/HW-pre-scaled Linear weight.
       gamma2, beta2: [1, E]   BatchNorm1d affine params.
    Returns [B, E] f32 == BatchNorm1d(Linear(avgpool(feat)) + bias), training mode.
    """
    B, H, W, C = feat_maps.shape
    HW = H * W
    E_pad = wt.shape[1]
    E = gamma2.shape[-1]
    itemsize = feat_maps.dtype.itemsize

    use_2d = (C % 128 == 0)
    if use_2d:
        # Lane-dense slab: one contiguous DMA per tile, no HW->sublane padding
        # (matters for the real HW=49, which the 3-D layout would pad to 64).
        feat = feat_maps.reshape(B, HW * C)
        feat_row_bytes = HW * C * itemsize
        kernel = _make_pool_linear_kernel_2d(HW, C)
        feat_spec = None  # built after TB is known
    else:
        feat = feat_maps.reshape(B, HW, C)
        feat_row_bytes = _round_up(HW, 16) * _round_up(C, 128) * itemsize
        kernel = _pool_linear_kernel_3d

    # Per-generation VMEM budget (derived, not hard-coded: fixes the old 96 MiB
    # cap that exceeded v7x's 64 MiB), with headroom for compiler scratch.
    vmem_budget = max(_vmem_capacity_bytes() - (12 << 20), 24 << 20)

    row_bytes = feat_row_bytes + E_pad * 4                  # feature row + f32 out row
    fixed_bytes = 2 * C * E_pad * wt.dtype.itemsize + (4 << 20)
    TB = _pick_batch_tile(B, row_bytes, fixed_bytes, vmem_budget, max_batch_tile)
    grid = (pl.cdiv(B, TB),)

    est = 2 * TB * row_bytes + fixed_bytes                  # double-buffered working set
    vmem_limit = int(min(max(est + (8 << 20), 32 << 20), vmem_budget))

    bytes_accessed = int(feat_maps.size * itemsize + wt.size * wt.dtype.itemsize
                         + B * E_pad * 4)
    cost = pl.CostEstimate(flops=int(2 * B * C * E_pad + B * HW * C),
                           transcendentals=0, bytes_accessed=bytes_accessed)

    if use_2d:
        feat_spec = pl.BlockSpec((TB, HW * C), lambda i: (i, 0))
    else:
        feat_spec = pl.BlockSpec((TB, HW, C), lambda i: (i, 0, 0))

    # --- streamed pool + Linear (HBM-bandwidth-bound part) ---
    y = pl.pallas_call(
        kernel,
        out_shape=jax.ShapeDtypeStruct((B, E_pad), jnp.float32),
        grid=grid,
        in_specs=[feat_spec,
                  pl.BlockSpec((C, E_pad), lambda i: (0, 0))],
        out_specs=pl.BlockSpec((TB, E_pad), lambda i: (i, 0)),
        compiler_params=pltpu.CompilerParams(
            dimension_semantics=("parallel",),
            vmem_limit_bytes=vmem_limit),
        cost_estimate=cost,
    )(feat, wt)

    if E_pad != E:
        y = y[:, :E]        # drop lane padding before computing batch statistics

    # --- tiny BatchNorm1d on [B, E]; single full-array block.  (Review: could be
    # plain jnp / XLA-fused; kept in Pallas so the whole forward stays in-kernel —
    # the cost is negligible next to the streamed pass above.) ---
    out = pl.pallas_call(
        batchnorm_kernel,
        out_shape=jax.ShapeDtypeStruct((B, E), jnp.float32),
        grid=(1,),
        in_specs=[pl.BlockSpec((B, E), lambda i: (0, 0)),
                  pl.BlockSpec((1, E), lambda i: (0, 0)),
                  pl.BlockSpec((1, E), lambda i: (0, 0))],
        out_specs=pl.BlockSpec((B, E), lambda i: (0, 0)),
        compiler_params=pltpu.CompilerParams(
            dimension_semantics=("arbitrary",)),
    )(y, gamma2, beta2)
    return out


if __name__ == "__main__":
    # TODO(synk): the frozen, pretrained ResNet-152 conv trunk (torch.no_grad) is
    # upstream compute and is not re-implemented in-kernel; the kernel consumes its
    # feature maps in TPU-native NHWC layout [B, H, W, C], bf16.

    def reference(feat_maps, w, b, gamma, beta):
        # Pure-JAX reference of the module forward using the same bf16 MXU operands
        # as the kernel.  The Linear bias IS applied here to demonstrate that
        # training-mode BN cancels it exactly.
        B, H, W, C = feat_maps.shape
        pooled = feat_maps.astype(jnp.float32).reshape(B, H * W, C).mean(axis=1)
        y = jnp.dot(pooled.astype(jnp.bfloat16), w.T.astype(jnp.bfloat16),
                    preferred_element_type=jnp.float32) + b
        mu = y.mean(0, keepdims=True)
        var = ((y - mu) ** 2).mean(0, keepdims=True)
        return (y - mu) / jnp.sqrt(var + EPS) * gamma + beta

    def run_case(key, B, H, W, C, E):
        k1, k2, k3 = jax.random.split(key, 3)
        feat_maps = jax.random.normal(k1, (B, H, W, C), jnp.float32).astype(jnp.bfloat16)
        w = jax.random.normal(k2, (E, C), jnp.float32) / jnp.sqrt(C)   # PyTorch [E, C]
        b = jax.random.normal(k3, (E,), jnp.float32) * 0.01
        gamma = jnp.ones((E,), jnp.float32)
        beta = jnp.zeros((E,), jnp.float32)

        wt, g2, be2 = prepare_params(w, b, gamma, beta, hw=H * W)  # once, off hot path
        out = jax.block_until_ready(enc_forward(feat_maps, wt, g2, be2))
        ref = reference(feat_maps, w, b, gamma, beta)
        assert out.shape == (B, E)
        assert jnp.allclose(out, ref, atol=5e-3, rtol=5e-3), \
            f"mismatch vs reference for case {(B, H, W, C, E)}"

    key = jax.random.PRNGKey(0)
    k_a, k_b, k_c = jax.random.split(key, 3)
    # Small stand-ins for the real [B, 7, 7, 2048] -> embed_size feature stream.
    run_case(k_a, B=32, H=4, W=4, C=256, E=128)   # lane-dense 2-D path, grid = 2
    run_case(k_b, B=20, H=4, W=4, C=256, E=96)    # partial last tile + E padded to 128
    run_case(k_c, B=16, H=4, W=4, C=192, E=128)   # 3-D fallback path (C % 128 != 0)
    print("KERNEL_OK")
</pallas_src>

<mosaic_0001>
module attributes {stable_mosaic.version = 11 : i64} {
  func.func @kernel(%arg0: i32, %arg1: memref<16x4096xbf16, #tpu.memory_space<vmem>>, %arg2: memref<256x128xbf16, #tpu.memory_space<vmem>>, %arg3: memref<16x128xf32, #tpu.memory_space<vmem>>) attributes {dimension_semantics = [#tpu.dimension_semantics<parallel>], iteration_bounds = array<i64: 2>, scalar_prefetch = 0 : i64, scratch_operands = 0 : i64, tpu.core_type = #tpu.core_type<tc>, window_params = [{transform_indices = @transform_0, window_bounds = array<i64: 16, 4096>}, {pipeline_mode = #tpu.pipeline_mode<synchronous>, transform_indices = @transform_1, window_bounds = array<i64: 256, 128>}, {transform_indices = @transform_2, window_bounds = array<i64: 16, 128>}]} {
    %cst = arith.constant 0.000000e+00 : f32
    %0 = vector.broadcast %cst : f32 to vector<16x256xf32>
    %c0 = arith.constant 0 : index
    %c0_0 = arith.constant 0 : index
    %1 = vector.load %arg1[%c0, %c0_0] : memref<16x4096xbf16, #tpu.memory_space<vmem>>, vector<16x256xbf16>
    %2 = arith.extf %1 : vector<16x256xbf16> to vector<16x256xf32>
    %3 = arith.addf %0, %2 : vector<16x256xf32>
    %c0_1 = arith.constant 0 : index
    %c256 = arith.constant 256 : index
    %4 = vector.load %arg1[%c0_1, %c256] : memref<16x4096xbf16, #tpu.memory_space<vmem>>, vector<16x256xbf16>
    %5 = arith.extf %4 : vector<16x256xbf16> to vector<16x256xf32>
    %6 = arith.addf %3, %5 : vector<16x256xf32>
    %c0_2 = arith.constant 0 : index
    %c512 = arith.constant 512 : index
    %7 = vector.load %arg1[%c0_2, %c512] : memref<16x4096xbf16, #tpu.memory_space<vmem>>, vector<16x256xbf16>
    %8 = arith.extf %7 : vector<16x256xbf16> to vector<16x256xf32>
    %9 = arith.addf %6, %8 : vector<16x256xf32>
    %c0_3 = arith.constant 0 : index
    %c768 = arith.constant 768 : index
    %10 = vector.load %arg1[%c0_3, %c768] : memref<16x4096xbf16, #tpu.memory_space<vmem>>, vector<16x256xbf16>
    %11 = arith.extf %10 : vector<16x256xbf16> to vector<16x256xf32>
    %12 = arith.addf %9, %11 : vector<16x256xf32>
    %c0_4 = arith.constant 0 : index
    %c1024 = arith.constant 1024 : index
    %13 = vector.load %arg1[%c0_4, %c1024] : memref<16x4096xbf16, #tpu.memory_space<vmem>>, vector<16x256xbf16>
    %14 = arith.extf %13 : vector<16x256xbf16> to vector<16x256xf32>
    %15 = arith.addf %12, %14 : vector<16x256xf32>
    %c0_5 = arith.constant 0 : index
    %c1280 = arith.constant 1280 : index
    %16 = vector.load %arg1[%c0_5, %c1280] : memref<16x4096xbf16, #tpu.memory_space<vmem>>, vector<16x256xbf16>
    %17 = arith.extf %16 : vector<16x256xbf16> to vector<16x256xf32>
    %18 = arith.addf %15, %17 : vector<16x256xf32>
    %c0_6 = arith.constant 0 : index
    %c1536 = arith.constant 1536 : index
    %19 = vector.load %arg1[%c0_6, %c1536] : memref<16x4096xbf16, #tpu.memory_space<vmem>>, vector<16x256xbf16>
    %20 = arith.extf %19 : vector<16x256xbf16> to vector<16x256xf32>
    %21 = arith.addf %18, %20 : vector<16x256xf32>
    %c0_7 = arith.constant 0 : index
    %c1792 = arith.constant 1792 : index
    %22 = vector.load %arg1[%c0_7, %c1792] : memref<16x4096xbf16, #tpu.memory_space<vmem>>, vector<16x256xbf16>
    %23 = arith.extf %22 : vector<16x256xbf16> to vector<16x256xf32>
    %24 = arith.addf %21, %23 : vector<16x256xf32>
    %c0_8 = arith.constant 0 : index
    %c2048 = arith.constant 2048 : index
    %25 = vector.load %arg1[%c0_8, %c2048] : memref<16x4096xbf16, #tpu.memory_space<vmem>>, vector<16x256xbf16>
    %26 = arith.extf %25 : vector<16x256xbf16> to vector<16x256xf32>
    %27 = arith.addf %24, %26 : vector<16x256xf32>
    %c0_9 = arith.constant 0 : index
    %c2304 = arith.constant 2304 : index
    %28 = vector.load %arg1[%c0_9, %c2304] : memref<16x4096xbf16, #tpu.memory_space<vmem>>, vector<16x256xbf16>
    %29 = arith.extf %28 : vector<16x256xbf16> to vector<16x256xf32>
    %30 = arith.addf %27, %29 : vector<16x256xf32>
    %c0_10 = arith.constant 0 : index
    %c2560 = arith.constant 2560 : index
    %31 = vector.load %arg1[%c0_10, %c2560] : memref<16x4096xbf16, #tpu.memory_space<vmem>>, vector<16x256xbf16>
    %32 = arith.extf %31 : vector<16x256xbf16> to vector<16x256xf32>
    %33 = arith.addf %30, %32 : vector<16x256xf32>
    %c0_11 = arith.constant 0 : index
    %c2816 = arith.constant 2816 : index
    %34 = vector.load %arg1[%c0_11, %c2816] : memref<16x4096xbf16, #tpu.memory_space<vmem>>, vector<16x256xbf16>
    %35 = arith.extf %34 : vector<16x256xbf16> to vector<16x256xf32>
    %36 = arith.addf %33, %35 : vector<16x256xf32>
    %c0_12 = arith.constant 0 : index
    %c3072 = arith.constant 3072 : index
    %37 = vector.load %arg1[%c0_12, %c3072] : memref<16x4096xbf16, #tpu.memory_space<vmem>>, vector<16x256xbf16>
    %38 = arith.extf %37 : vector<16x256xbf16> to vector<16x256xf32>
    %39 = arith.addf %36, %38 : vector<16x256xf32>
    %c0_13 = arith.constant 0 : index
    %c3328 = arith.constant 3328 : index
    %40 = vector.load %arg1[%c0_13, %c3328] : memref<16x4096xbf16, #tpu.memory_space<vmem>>, vector<16x256xbf16>
    %41 = arith.extf %40 : vector<16x256xbf16> to vector<16x256xf32>
    %42 = arith.addf %39, %41 : vector<16x256xf32>
    %c0_14 = arith.constant 0 : index
    %c3584 = arith.constant 3584 : index
    %43 = vector.load %arg1[%c0_14, %c3584] : memref<16x4096xbf16, #tpu.memory_space<vmem>>, vector<16x256xbf16>
    %44 = arith.extf %43 : vector<16x256xbf16> to vector<16x256xf32>
    %45 = arith.addf %42, %44 : vector<16x256xf32>
    %c0_15 = arith.constant 0 : index
    %c3840 = arith.constant 3840 : index
    %46 = vector.load %arg1[%c0_15, %c3840] : memref<16x4096xbf16, #tpu.memory_space<vmem>>, vector<16x256xbf16>
    %47 = arith.extf %46 : vector<16x256xbf16> to vector<16x256xf32>
    %48 = arith.addf %45, %47 : vector<16x256xf32>
    %49 = arith.truncf %48 : vector<16x256xf32> to vector<16x256xbf16>
    %c0_16 = arith.constant 0 : index
    %c0_17 = arith.constant 0 : index
    %50 = vector.load %arg2[%c0_16, %c0_17] : memref<256x128xbf16, #tpu.memory_space<vmem>>, vector<256x128xbf16>
    %cst_18 = arith.constant dense<0.000000e+00> : vector<16x128xf32>
    %51 = tpu.matmul %49, %50, %cst_18 {dimension_numbers = #tpu.dot_dimension_numbers<[1], [0], [0], [1], [0, 0, 1, 1], [], []>} : vector<16x256xbf16>, vector<256x128xbf16>, vector<16x128xf32> -> vector<16x128xf32>
    %c0_19 = arith.constant 0 : index
    %c0_20 = arith.constant 0 : index
    %52 = vector.load %arg3[%c0_19, %c0_20] : memref<16x128xf32, #tpu.memory_space<vmem>>, vector<16x128xf32>
    tpu.vector_store %arg3[%c0_19, %c0_20], %51 {strides = array<i32>} : memref<16x128xf32, #tpu.memory_space<vmem>>, vector<16x128xf32>,
    return
  }
  func.func @transform_0(%arg0: i32) -> (i32, i32) {
    %c0_i32 = arith.constant 0 : i32
    %c0_i32_0 = arith.constant 0 : i32
    return %arg0, %c0_i32 : i32, i32
  }
  func.func @transform_1(%arg0: i32) -> (i32, i32) {
    %c0_i32 = arith.constant 0 : i32
    %c0_i32_0 = arith.constant 0 : i32
    %c0_i32_1 = arith.constant 0 : i32
    return %c0_i32, %c0_i32_0 : i32, i32
  }
  func.func @transform_2(%arg0: i32) -> (i32, i32) {
    %c0_i32 = arith.constant 0 : i32
    %c0_i32_0 = arith.constant 0 : i32
    return %arg0, %c0_i32 : i32, i32
  }
}

</mosaic_0001>

<llo_original>
// kernel: tpu_custom_call.1
$region0: #{tpu_custom_call.1}
  #allocation0 [shape = 'u32[]', space=smem, size = 0x4, offset = 0x4, fixed_abs, tag = 'smem constant byte address 0x4 - core index']
  #allocation1 [shape = 'u32[72,128]{1,0:T(1,128)}', space=vmem, size = 0x9000, scoped, tag = 'internal scratch']
  %s0 = inlined_call_operand.hbm [shape: bf16[32,4096], index: 0, kind: input, shape index: {}]
  %s1 = inlined_call_operand.hbm [shape: bf16[256,128], index: 1, kind: input, shape index: {}]
  %s2 = inlined_call_operand.hbm [shape: f32[32,128], index: 2, kind: output, shape index: {}]
  %s3 = sld [smem:[#allocation0]]
  $region49: #{tpu_custom_call.1} parent=0
    _
  %s5 = ssub.s32 1, %s3
  %s6 = scalar_select 0, %s5, %s3
  $region1: #{tpu_custom_call.1} parent=0
    #allocation2 [shape = 'u8[262144]{0}', space=vmem, size = 0x40000, scoped, tag = 'input window, operand 0']
    #allocation3 [shape = 's32[2]{0}', space=sflag, size = 0x8, scoped, tag = 'scoped memory for tpu_custom_call.1']
    #allocation4 [shape = 's32[2]{0}', space=sflag, size = 0x8, scoped, tag = 'scoped memory for tpu_custom_call.1']
    #allocation5 [shape = 'u8[65536]{0}', space=vmem, size = 0x10000, scoped, tag = 'input window, operand 1, single buffered']
    #allocation6 [shape = 's32[1]{0}', space=sflag, size = 0x4, scoped, tag = 'scoped memory for tpu_custom_call.1']
    #allocation7 [shape = 'u8[16384]{0}', space=vmem, size = 0x4000, scoped, tag = 'output window, operand 0']
    %7 = vsyncpa [#allocation3], 0
    %s8 = scalar_lea.sflag [#allocation3], 1
    %9 = vsyncpa %s8, 0
    %10 = vsyncpa [#allocation6], 0
    %11 = vsyncpa [#allocation4], 0
    %s12 = scalar_lea.sflag [#allocation4], 1
    %13 = vsyncpa %s12, 0
    loop: start=0, step=1, limit=4
    $region2: #{tpu_custom_call.1} parent=1 // loop_pre_header
      _
    $region3: #{tpu_custom_call.1} parent=1 // loop_header
      %s15 = sphi 0, %s19
      %p16 = scmp.ge.s32.totalorder %s15, 4
      %s25 = sphi 0, %s27
      %s28 = sphi 0, %s25
      %s29 = sphi 0, %s28
      %s45 = sphi 0, %s29
      %s49 = sphi 0, %s49
      %s51 = sphi 0, %s49
      %s52 = sphi 0, %s51
      %s66 = sphi 0, %s52
      %s72 = sphi 0, %s74
      %s75 = sphi 0, %s72
      %s76 = sphi 0, %s75
      %s92 = sphi 0, %s76
    $region4: #{tpu_custom_call.1} parent=1 // loop_header_branch
      %18 = sbr.rel (%p16) target = $region8
    $region5: #{tpu_custom_call.1} parent=1 // loop_body
      %s20 = ssub.s32 %s15, 1
      %s21 = ssub.s32 %s15, 2
      %s22 = sadd.s32 %s15, 1
      %s23 = ssub.s32 %s15, %s22
      %p24 = scmp.eq.s32.totalorder %s23, 0
      %s26 = sadd.s32 %s25, 1
      %s27 = scalar_select %p24, %s25, %s26
      %p30 = pneg %p24
      %p31 = scmp.eq.s32.totalorder %s15, 1
      %p32 = por %p30, %p31
      %p33 = scmp.ne.s32.totalorder %s25, %s28
      %p34 = scmp.eq.s32.totalorder %s15, 0
      %p35 = por %p33, %p34
      %p36 = scmp.ne.s32.totalorder %s25, %s28
      %p37 = scmp.eq.s32.totalorder %s20, 1
      %p38 = por %p36, %p37
      %p39 = scmp.ne.s32.totalorder %s28, %s29
      %p40 = scmp.eq.s32.totalorder %s20, 0
      %p41 = por %p39, %p40
      %p42 = scmp.ne.s32.totalorder %s28, %s29
      %p43 = scmp.eq.s32.totalorder %s21, 1
      %p44 = por %p42, %p43
      %p46 = scmp.ne.s32.totalorder %s29, %s45
      %p47 = scmp.eq.s32.totalorder %s21, 0
      %p48 = por %p46, %p47
      %s50 = sadd.s32 %s49, 1
      %p53 = scmp.eq.s32.totalorder %s15, 1
      %p54 = scmp.ne.s32.totalorder %s49, %s51
      %p55 = scmp.eq.s32.totalorder %s15, 0
      %p56 = por %p54, %p55
      %p57 = scmp.ne.s32.totalorder %s49, %s51
      %p58 = scmp.eq.s32.totalorder %s20, 1
      %p59 = por %p57, %p58
      %p60 = scmp.ne.s32.totalorder %s51, %s52
      %p61 = scmp.eq.s32.totalorder %s20, 0
      %p62 = por %p60, %p61
      %p63 = scmp.ne.s32.totalorder %s51, %s52
      %p64 = scmp.eq.s32.totalorder %s21, 1
      %p65 = por %p63, %p64
      %p67 = scmp.ne.s32.totalorder %s52, %s66
      %p68 = scmp.eq.s32.totalorder %s21, 0
      %p69 = por %p67, %p68
      %s70 = ssub.s32 %s15, %s22
      %p71 = scmp.eq.s32.totalorder %s70, 0
      %s73 = sadd.s32 %s72, 1
      %s74 = scalar_select %p71, %s72, %s73
      %p77 = pneg %p71
      %p78 = scmp.eq.s32.totalorder %s15, 1
      %p79 = por %p77, %p78
      %p80 = scmp.ne.s32.totalorder %s72, %s75
      %p81 = scmp.eq.s32.totalorder %s15, 0
      %p82 = por %p80, %p81
      %p83 = scmp.ne.s32.totalorder %s72, %s75
      %p84 = scmp.eq.s32.totalorder %s20, 1
      %p85 = por %p83, %p84
      %p86 = scmp.ne.s32.totalorder %s75, %s76
      %p87 = scmp.eq.s32.totalorder %s20, 0
      %p88 = por %p86, %p87
      %p89 = scmp.ne.s32.totalorder %s75, %s76
      %p90 = scmp.eq.s32.totalorder %s21, 1
      %p91 = por %p89, %p90
      %p93 = scmp.ne.s32.totalorder %s76, %s92
      %p94 = scmp.eq.s32.totalorder %s21, 0
      %p95 = por %p93, %p94
      %p96 = scmp.le.s32.totalorder 1, %s15
      %p97 = scmp.lt.s32.totalorder %s15, 3
      %p98 = pnand %p96, %p97
      %p99 = pneg %p98
      // Predicated region
      $region9: #{tpu_custom_call.1} parent=5 // pred_check
        _
      $region10: #{tpu_custom_call.1} parent=5 // pred_check_branch
        %101 = sbr.rel (%p98) target = $region12
      $region11: #{tpu_custom_call.1} parent=5 // pred_region
        %s102 = ssub.s32 %s15, 1
        // Predicated region
        $region13: #{tpu_custom_call.1} parent=11 // pred_check
          %p103 = pneg %p62
        $region14: #{tpu_custom_call.1} parent=11 // pred_check_branch
          %105 = sbr.rel (%p103) target = $region16
        $region15: #{tpu_custom_call.1} parent=11 // pred_region
          %107 = vsyncadd [#allocation6], 0
          %s108 = sshll.u32 %s1, 4
          %s109 = int_to_ptr.hbm [resolvable:$true] %s108
          %s110 = sshll.u32 [#allocation5], 4
          %s111 = int_to_ptr.vmem [resolvable:$true] %s110
          %116 = dma.hbm_to_vmem [thread:$0]  %s109, 2048, %s111, [#allocation6], 64, 64, 4
        $region16: #{tpu_custom_call.1} parent=11 // pred_fallthru
          _
      $region12: #{tpu_custom_call.1} parent=5 // pred_fallthru
        _
      %p117 = scmp.lt.s32.totalorder %s15, 2
      // Predicated region
      $region17: #{tpu_custom_call.1} parent=5 // pred_check
        %p118 = pneg %p117
      $region18: #{tpu_custom_call.1} parent=5 // pred_check_branch
        %120 = sbr.rel (%p118) target = $region20
      $region19: #{tpu_custom_call.1} parent=5 // pred_region
        // Predicated region
        $region21: #{tpu_custom_call.1} parent=19 // pred_check
          %p121 = pneg %p35
        $region22: #{tpu_custom_call.1} parent=19 // pred_check_branch
          %123 = sbr.rel (%p121) target = $region24
        $region23: #{tpu_custom_call.1} parent=19 // pred_region
          %s124 = sand.u32 %s25, 1
          %s125 = scalar_lea.sflag [#allocation3], %s124
          %s126 = sand.u32 %s25, 1
          %s127 = smul.addr %s126, 256
          %s128 = scalar_lea.vmem [#allocation2], %s127
          %s129 = smul.u32 2, %s15
          %131 = vsyncadd %s125, 0
          %s132 = smul.addr %s129, 32
          %s133 = smul.addr %s132, 4
          %s134 = scalar_lea.hbm %s0, %s133
          %s135 = sshll.u32 %s134, 4
          %s136 = int_to_ptr.hbm [resolvable:$true] %s135
          %s137 = sshll.u32 %s128, 4
          %s138 = int_to_ptr.vmem [resolvable:$true] %s137
          %143 = dma.hbm_to_vmem [thread:$0]  %s136, 4096, %s138, %s125, 2048, 2048, 128
        $region24: #{tpu_custom_call.1} parent=19 // pred_fallthru
          _
      $region20: #{tpu_custom_call.1} parent=5 // pred_fallthru
        _
      %p144 = scmp.le.s32.totalorder 1, %s15
      %p145 = scmp.lt.s32.totalorder %s15, 3
      %p146 = pnand %p144, %p145
      %p147 = pneg %p146
      // Predicated region
      $region25: #{tpu_custom_call.1} parent=5 // pred_check
        _
      $region26: #{tpu_custom_call.1} parent=5 // pred_check_branch
        %149 = sbr.rel (%p146) target = $region28
      $region27: #{tpu_custom_call.1} parent=5 // pred_region
        %s150 = ssub.s32 %s15, 1
        %s151 = sand.u32 %s28, 1
        %s152 = scalar_lea.sflag [#allocation3], %s151
        %s153 = sand.u32 %s28, 1
        %s154 = smul.addr %s153, 256
        %s155 = scalar_lea.vmem [#allocation2], %s154
        // Predicated region
        $region29: #{tpu_custom_call.1} parent=27 // pred_check
          %p156 = pneg %p41
        $region30: #{tpu_custom_call.1} parent=27 // pred_check_branch
          %158 = sbr.rel (%p156) target = $region32
        $region31: #{tpu_custom_call.1} parent=27 // pred_region
          %160 = dma.done %s152, 4096
        $region32: #{tpu_custom_call.1} parent=27 // pred_fallthru
          _
        // Predicated region
        $region33: #{tpu_custom_call.1} parent=27 // pred_check
          %p161 = pneg %p62
        $region34: #{tpu_custom_call.1} parent=27 // pred_check_branch
          %163 = sbr.rel (%p161) target = $region36
        $region35: #{tpu_custom_call.1} parent=27 // pred_region
          %165 = dma.done [#allocation6], 2048
        $region36: #{tpu_custom_call.1} parent=27 // pred_fallthru
          _
        %s166 = sand.u32 %s28, 1
        %s167 = scalar_lea.sflag [#allocation3], %s166
        %s168 = sand.u32 %s28, 1
        %s169 = smul.addr %s168, 256
        %s170 = scalar_lea.vmem [#allocation2], %s169
        %p171 = pneg %p41
        %p172 = pneg %p38
        %p173 = pneg %p62
        %p174 = pneg %p59
        %p175 = pneg %p88
        %p176 = pneg %p85
        %s177 = sand.u32 %s75, 1
        %s178 = scalar_lea.sflag [#allocation4], %s177
        %s179 = sand.u32 %s75, 1
        %s180 = smul.addr %s179, 16
        %s181 = scalar_lea.vmem [#allocation7], %s180
        %s182 = smul.u32 2, %s20
        %s183 = smul.u32 2, %s20
        %v184 = vld [vmem:[%s155] sm:$0xff]
        %v185 = vld [vmem:[%s155 + $0x80] sm:$0xff]
        %v186 = vunpack.c.l.bf16 %v184
        %v187 = vunpack.c.h.bf16 %v184
        %v188 = vunpack.c.l.bf16 %v185
        %v189 = vunpack.c.h.bf16 %v185
        %v190 = vadd.f32 %v186, 0.0
        %v191 = vadd.f32 %v187, 0.0
        %v192 = vadd.f32 %v188, 0.0
        %v193 = vadd.f32 %v189, 0.0
        %v194 = vld [vmem:[%s155 + $0x8] sm:$0xff]
        %v195 = vld [vmem:[%s155 + $0x88] sm:$0xff]
        %v196 = vunpack.c.l.bf16 %v194
        %v197 = vunpack.c.h.bf16 %v194
        %v198 = vunpack.c.l.bf16 %v195
        %v199 = vunpack.c.h.bf16 %v195
        %v200 = vadd.f32 %v190, %v196
        %v201 = vadd.f32 %v191, %v197
        %v202 = vadd.f32 %v192, %v198
        %v203 = vadd.f32 %v193, %v199
        %v204 = vld [vmem:[%s155 + $0x10] sm:$0xff]
        %v205 = vld [vmem:[%s155 + $0x90] sm:$0xff]
        %v206 = vunpack.c.l.bf16 %v204
        %v207 = vunpack.c.h.bf16 %v204
        %v208 = vunpack.c.l.bf16 %v205
        %v209 = vunpack.c.h.bf16 %v205
        %v210 = vadd.f32 %v200, %v206
        %v211 = vadd.f32 %v201, %v207
        %v212 = vadd.f32 %v202, %v208
        %v213 = vadd.f32 %v203, %v209
        %v214 = vld [vmem:[%s155 + $0x18] sm:$0xff]
        %v215 = vld [vmem:[%s155 + $0x98] sm:$0xff]
        %v216 = vunpack.c.l.bf16 %v214
        %v217 = vunpack.c.h.bf16 %v214
        %v218 = vunpack.c.l.bf16 %v215
        %v219 = vunpack.c.h.bf16 %v215
        %v220 = vadd.f32 %v210, %v216
        %v221 = vadd.f32 %v211, %v217
        %v222 = vadd.f32 %v212, %v218
        %v223 = vadd.f32 %v213, %v219
        %v224 = vld [vmem:[%s155 + $0x20] sm:$0xff]
        %v225 = vld [vmem:[%s155 + $0xa0] sm:$0xff]
        %v226 = vunpack.c.l.bf16 %v224
        %v227 = vunpack.c.h.bf16 %v224
        %v228 = vunpack.c.l.bf16 %v225
        %v229 = vunpack.c.h.bf16 %v225
        %v230 = vadd.f32 %v220, %v226
        %v231 = vadd.f32 %v221, %v227
        %v232 = vadd.f32 %v222, %v228
        %v233 = vadd.f32 %v223, %v229
        %v234 = vld [vmem:[%s155 + $0x28] sm:$0xff]
        %v235 = vld [vmem:[%s155 + $0xa8] sm:$0xff]
        %v236 = vunpack.c.l.bf16 %v234
        %v237 = vunpack.c.h.bf16 %v234
        %v238 = vunpack.c.l.bf16 %v235
        %v239 = vunpack.c.h.bf16 %v235
        %v240 = vadd.f32 %v230, %v236
        %v241 = vadd.f32 %v231, %v237
        %v242 = vadd.f32 %v232, %v238
        %v243 = vadd.f32 %v233, %v239
        %v244 = vld [vmem:[%s155 + $0x30] sm:$0xff]
        %v245 = vld [vmem:[%s155 + $0xb0] sm:$0xff]
        %v246 = vunpack.c.l.bf16 %v244
        %v247 = vunpack.c.h.bf16 %v244
        %v248 = vunpack.c.l.bf16 %v245
        %v249 = vunpack.c.h.bf16 %v245
        %v250 = vadd.f32 %v240, %v246
        %v251 = vadd.f32 %v241, %v247
        %v252 = vadd.f32 %v242, %v248
        %v253 = vadd.f32 %v243, %v249
        %v254 = vld [vmem:[%s155 + $0x38] sm:$0xff]
        %v255 = vld [vmem:[%s155 + $0xb8] sm:$0xff]
        %v256 = vunpack.c.l.bf16 %v254
        %v257 = vunpack.c.h.bf16 %v254
        %v258 = vunpack.c.l.bf16 %v255
        %v259 = vunpack.c.h.bf16 %v255
        %v260 = vadd.f32 %v250, %v256
        %v261 = vadd.f32 %v251, %v257
        %v262 = vadd.f32 %v252, %v258
        %v263 = vadd.f32 %v253, %v259
        %v264 = vld [vmem:[%s155 + $0x40] sm:$0xff]
        %v265 = vld [vmem:[%s155 + $0xc0] sm:$0xff]
        %v266 = vunpack.c.l.bf16 %v264
        %v267 = vunpack.c.h.bf16 %v264
        %v268 = vunpack.c.l.bf16 %v265
        %v269 = vunpack.c.h.bf16 %v265
        %v270 = vadd.f32 %v260, %v266
        %v271 = vadd.f32 %v261, %v267
        %v272 = vadd.f32 %v262, %v268
        %v273 = vadd.f32 %v263, %v269
        %v274 = vld [vmem:[%s155 + $0x48] sm:$0xff]
        %v275 = vld [vmem:[%s155 + $0xc8] sm:$0xff]
        %v276 = vunpack.c.l.bf16 %v274
        %v277 = vunpack.c.h.bf16 %v274
        %v278 = vunpack.c.l.bf16 %v275
        %v279 = vunpack.c.h.bf16 %v275
        %v280 = vadd.f32 %v270, %v276
        %v281 = vadd.f32 %v271, %v277
        %v282 = vadd.f32 %v272, %v278
        %v283 = vadd.f32 %v273, %v279
        %v284 = vld [vmem:[%s155 + $0x50] sm:$0xff]
        %v285 = vld [vmem:[%s155 + $0xd0] sm:$0xff]
        %v286 = vunpack.c.l.bf16 %v284
        %v287 = vunpack.c.h.bf16 %v284
        %v288 = vunpack.c.l.bf16 %v285
        %v289 = vunpack.c.h.bf16 %v285
        %v290 = vadd.f32 %v280, %v286
        %v291 = vadd.f32 %v281, %v287
        %v292 = vadd.f32 %v282, %v288
        %v293 = vadd.f32 %v283, %v289
        %v294 = vld [vmem:[%s155 + $0x58] sm:$0xff]
        %v295 = vld [vmem:[%s155 + $0xd8] sm:$0xff]
        %v296 = vunpack.c.l.bf16 %v294
        %v297 = vunpack.c.h.bf16 %v294
        %v298 = vunpack.c.l.bf16 %v295
        %v299 = vunpack.c.h.bf16 %v295
        %v300 = vadd.f32 %v290, %v296
        %v301 = vadd.f32 %v291, %v297
        %v302 = vadd.f32 %v292, %v298
        %v303 = vadd.f32 %v293, %v299
        %v304 = vld [vmem:[%s155 + $0x60] sm:$0xff]
        %v305 = vld [vmem:[%s155 + $0xe0] sm:$0xff]
        %v306 = vunpack.c.l.bf16 %v304
        %v307 = vunpack.c.h.bf16 %v304
        %v308 = vunpack.c.l.bf16 %v305
        %v309 = vunpack.c.h.bf16 %v305
        %v310 = vadd.f32 %v300, %v306
        %v311 = vadd.f32 %v301, %v307
        %v312 = vadd.f32 %v302, %v308
        %v313 = vadd.f32 %v303, %v309
        %v314 = vld [vmem:[%s155 + $0x68] sm:$0xff]
        %v315 = vld [vmem:[%s155 + $0xe8] sm:$0xff]
        %v316 = vunpack.c.l.bf16 %v314
        %v317 = vunpack.c.h.bf16 %v314
        %v318 = vunpack.c.l.bf16 %v315
        %v319 = vunpack.c.h.bf16 %v315
        %v320 = vadd.f32 %v310, %v316
        %v321 = vadd.f32 %v311, %v317
        %v322 = vadd.f32 %v312, %v318
        %v323 = vadd.f32 %v313, %v319
        %v324 = vld [vmem:[%s155 + $0x70] sm:$0xff]
        %v325 = vld [vmem:[%s155 + $0xf0] sm:$0xff]
        %v326 = vunpack.c.l.bf16 %v324
        %v327 = vunpack.c.h.bf16 %v324
        %v328 = vunpack.c.l.bf16 %v325
        %v329 = vunpack.c.h.bf16 %v325
        %v330 = vadd.f32 %v320, %v326
        %v331 = vadd.f32 %v321, %v327
        %v332 = vadd.f32 %v322, %v328
        %v333 = vadd.f32 %v323, %v329
        %v334 = vld [vmem:[%s155 + $0x78] sm:$0xff]
        %v335 = vld [vmem:[%s155 + $0xf8] sm:$0xff]
        %v336 = vunpack.c.l.bf16 %v334
        %v337 = vunpack.c.h.bf16 %v334
        %v338 = vunpack.c.l.bf16 %v335
        %v339 = vunpack.c.h.bf16 %v335
        %v340 = vadd.f32 %v330, %v336
        %v341 = vadd.f32 %v331, %v337
        %v342 = vadd.f32 %v332, %v338
        %v343 = vadd.f32 %v333, %v339
        %v344 = vpack.c.bf16 %v342, %v340
        %v345 = vpack.c.bf16 %v343, %v341
        %v346 = vld [vmem:[#allocation5] sm:$0xf]
        %v347 = vld [vmem:[#allocation5 + $0x4] sm:$0xf]
        %v348 = vld [vmem:[#allocation5 + $0x8] sm:$0xf]
        %v349 = vld [vmem:[#allocation5 + $0xc] sm:$0xf]
        %v350 = vld [vmem:[#allocation5 + $0x10] sm:$0xf]
        %v351 = vld [vmem:[#allocation5 + $0x14] sm:$0xf]
        %v352 = vld [vmem:[#allocation5 + $0x18] sm:$0xf]
        %v353 = vld [vmem:[#allocation5 + $0x1c] sm:$0xf]
        %v354 = vld [vmem:[#allocation5 + $0x20] sm:$0xf]
        %v355 = vld [vmem:[#allocation5 + $0x24] sm:$0xf]
        %v356 = vld [vmem:[#allocation5 + $0x28] sm:$0xf]
        %v357 = vld [vmem:[#allocation5 + $0x2c] sm:$0xf]
        %v358 = vld [vmem:[#allocation5 + $0x30] sm:$0xf]
        %v359 = vld [vmem:[#allocation5 + $0x34] sm:$0xf]
        %v360 = vld [vmem:[#allocation5 + $0x38] sm:$0xf]
        %v361 = vld [vmem:[#allocation5 + $0x3c] sm:$0xf]
        %v362 = vld [vmem:[#allocation5 + $0x40] sm:$0xf]
        %v363 = vld [vmem:[#allocation5 + $0x44] sm:$0xf]
        %v364 = vld [vmem:[#allocation5 + $0x48] sm:$0xf]
        %v365 = vld [vmem:[#allocation5 + $0x4c] sm:$0xf]
        %v366 = vld [vmem:[#allocation5 + $0x50] sm:$0xf]
        %v367 = vld [vmem:[#allocation5 + $0x54] sm:$0xf]
        %v368 = vld [vmem:[#allocation5 + $0x58] sm:$0xf]
        %v369 = vld [vmem:[#allocation5 + $0x5c] sm:$0xf]
        %v370 = vld [vmem:[#allocation5 + $0x60] sm:$0xf]
        %v371 = vld [vmem:[#allocation5 + $0x64] sm:$0xf]
        %v372 = vld [vmem:[#allocation5 + $0x68] sm:$0xf]
        %v373 = vld [vmem:[#allocation5 + $0x6c] sm:$0xf]
        %v374 = vld [vmem:[#allocation5 + $0x70] sm:$0xf]
        %v375 = vld [vmem:[#allocation5 + $0x74] sm:$0xf]
        %v376 = vld [vmem:[#allocation5 + $0x78] sm:$0xf]
        %v377 = vld [vmem:[#allocation5 + $0x7c] sm:$0xf]
        %v410 = vunpack.c.l.b16 %v346
        %v411 = vunpack.c.l.b16 %v347
        %v412 = vunpack.c.l.b16 %v348
        %v413 = vunpack.c.l.b16 %v349
        %v414 = vunpack.c.l.b16 %v350
        %v415 = vunpack.c.l.b16 %v351
        %v416 = vunpack.c.l.b16 %v352
        %v417 = vunpack.c.l.b16 %v353
        %v418 = vunpack.c.l.b16 %v354
        %v419 = vunpack.c.l.b16 %v355
        %v420 = vunpack.c.l.b16 %v356
        %v421 = vunpack.c.l.b16 %v357
        %v422 = vunpack.c.l.b16 %v358
        %v423 = vunpack.c.l.b16 %v359
        %v424 = vunpack.c.l.b16 %v360
        %v425 = vunpack.c.l.b16 %v361
        %v426 = vunpack.c.l.b16 %v362
        %v427 = vunpack.c.l.b16 %v363
        %v428 = vunpack.c.l.b16 %v364
        %v429 = vunpack.c.l.b16 %v365
        %v430 = vunpack.c.l.b16 %v366
        %v431 = vunpack.c.l.b16 %v367
        %v432 = vunpack.c.l.b16 %v368
        %v433 = vunpack.c.l.b16 %v369
        %v434 = vunpack.c.l.b16 %v370
        %v435 = vunpack.c.l.b16 %v371
        %v436 = vunpack.c.l.b16 %v372
        %v437 = vunpack.c.l.b16 %v373
        %v438 = vunpack.c.l.b16 %v374
        %v439 = vunpack.c.l.b16 %v375
        %v440 = vunpack.c.l.b16 %v376
        %v441 = vunpack.c.l.b16 %v377
        %v442 = vpack.c.b16 %v411, %v410
        %v443 = vpack.c.b16 %v413, %v412
        %v444 = vpack.c.b16 %v415, %v414
        %v445 = vpack.c.b16 %v417, %v416
        %v446 = vpack.c.b16 %v419, %v418
        %v447 = vpack.c.b16 %v421, %v420
        %v448 = vpack.c.b16 %v423, %v422
        %v449 = vpack.c.b16 %v425, %v424
        %v450 = vpack.c.b16 %v427, %v426
        %v451 = vpack.c.b16 %v429, %v428
        %v452 = vpack.c.b16 %v431, %v430
        %v453 = vpack.c.b16 %v433, %v432
        %v454 = vpack.c.b16 %v435, %v434
        %v455 = vpack.c.b16 %v437, %v436
        %v456 = vpack.c.b16 %v439, %v438
        %v457 = vpack.c.b16 %v441, %v440
        %474 = vmatpush.bf16.msra.mxu0 %v449
        %475 = vmatpush.bf16.msra.mxu0 %v448
        %476 = vmatpush.bf16.msra.mxu0 %v447
        %477 = vmatpush.bf16.msra.mxu0 %v446
        %478 = vmatpush.bf16.msra.mxu0 %v445
        %479 = vmatpush.bf16.msra.mxu0 %v444
        %480 = vmatpush.bf16.msra.mxu0 %v443
        %481 = vmatpush.bf16.msra.mxu0 %v442
        %482 = vmatmul.bf16.gmra.mxu0 %v344
        %v483 = vpop.f32.mrf.mxu0
        %v484 = vadd.f32 0.0, %v483
        %v485 = vpop.f32.mrf.mxu0
        %v486 = vadd.f32 0.0, %v485
        %487 = vdwg.mxu0
        %488 = vmatpush.bf16.msra.mxu0 %v457
        %489 = vmatpush.bf16.msra.mxu0 %v456
        %490 = vmatpush.bf16.msra.mxu0 %v455
        %491 = vmatpush.bf16.msra.mxu0 %v454
        %492 = vmatpush.bf16.msra.mxu0 %v453
        %493 = vmatpush.bf16.msra.mxu0 %v452
        %494 = vmatpush.bf16.msra.mxu0 %v451
        %495 = vmatpush.bf16.msra.mxu0 %v450
        %496 = vmatmul.bf16.gmra.mxu0 %v345
        %v497 = vpop.f32.mrf.mxu0
        %v498 = vadd.f32 %v484, %v497
        %v499 = vpop.f32.mrf.mxu0
        %v500 = vadd.f32 %v486, %v499
        %501 = vdwg.mxu0
        %502 = vst [vmem:[%s181] sm:$0xff] %v498
        %503 = vst [vmem:[%s181 + $0x8] sm:$0xff] %v500
        %s504 = sand.u32 %s75, 1
        %s505 = scalar_lea.sflag [#allocation4], %s504
        %s506 = sand.u32 %s75, 1
        %s507 = smul.addr %s506, 16
        %s508 = scalar_lea.vmem [#allocation7], %s507
        // Predicated region
        $region37: #{tpu_custom_call.1} parent=27 // pred_check
          %p509 = pneg %p85
        $region38: #{tpu_custom_call.1} parent=27 // pred_check_branch
          %511 = sbr.rel (%p509) target = $region40
        $region39: #{tpu_custom_call.1} parent=27 // pred_region
          %s512 = smul.u32 2, %s20
          %514 = vsyncadd %s505, 0
          %s515 = smul.addr %s512, 8
          %s516 = scalar_lea.hbm %s2, %s515
          %s517 = sshll.u32 %s508, 4
          %s518 = int_to_ptr.vmem [resolvable:$true] %s517
          %s519 = sshll.u32 %s516, 4
          %s520 = int_to_ptr.hbm [resolvable:$true] %s519
          %525 = dma.vmem_to_hbm [thread:$0]  %s518, 256, %s520, %s505, 128, 128, 8
        $region40: #{tpu_custom_call.1} parent=27 // pred_fallthru
          _
      $region28: #{tpu_custom_call.1} parent=5 // pred_fallthru
        _
      %p526 = scmp.le.s32.totalorder 2, %s15
      // Predicated region
      $region41: #{tpu_custom_call.1} parent=5 // pred_check
        %p527 = pneg %p526
      $region42: #{tpu_custom_call.1} parent=5 // pred_check_branch
        %529 = sbr.rel (%p527) target = $region44
      $region43: #{tpu_custom_call.1} parent=5 // pred_region
        %s530 = ssub.s32 %s15, 2
        // Predicated region
        $region45: #{tpu_custom_call.1} parent=43 // pred_check
          %p531 = pneg %p91
        $region46: #{tpu_custom_call.1} parent=43 // pred_check_branch
          %533 = sbr.rel (%p531) target = $region48
        $region47: #{tpu_custom_call.1} parent=43 // pred_region
          %s534 = sand.u32 %s76, 1
          %s535 = scalar_lea.sflag [#allocation4], %s534
          %s536 = sand.u32 %s76, 1
          %s537 = smul.addr %s536, 16
          %s538 = scalar_lea.vmem [#allocation7], %s537
          %540 = dma.done %s535, 256
        $region48: #{tpu_custom_call.1} parent=43 // pred_fallthru
          _
      $region44: #{tpu_custom_call.1} parent=5 // pred_fallthru
        _
    $region6: #{tpu_custom_call.1} parent=1 // loop_footer
      %s19 = sadd.s32 1, %s15
    $region7: #{tpu_custom_call.1} parent=1 // loop_footer_branch
      %14 = sbr.rel target = $region3
    $region8: #{tpu_custom_call.1} parent=1 // loop_exit
      _
    %541 = vsyncpa [#allocation3], 1
    %s542 = scalar_lea.sflag [#allocation3], 1
    %543 = vsyncpa %s542, 1
    %544 = vsyncpa [#allocation6], 1
    %545 = vsyncpa [#allocation4], 1
    %s546 = scalar_lea.sflag [#allocation4], 1
    %547 = vsyncpa %s546, 1

</llo_original>
